<compile_context>
chip_gen: v7x
topology: tpu7x:2x2x1
jax: 0.10.0
libtpu: 0.0.40
codegen_flags: <defaults>
</compile_context>

<pallas_src>
import numpy as np
import jax
import jax.numpy as jnp
from jax.experimental import pallas as pl
from jax.experimental.pallas import tpu as pltpu

EPS = 1e-5  # nn.BatchNorm2d default eps


def _conv_bn_relu_slab(x, m_top, m_mid, m_bot, g, gt, gamma, beta, H):
    """One Conv3x3(+pad1) -> BN(train) -> ReLU stage on a lane-dense slab.

    x:        (N*H, W*Cin)   input slab, channels-fastest within each row
    m_top/mid/bot: (W*Cin, W*Cout)  dy = -1 / 0 / +1 blocks of the banded
                                    im2col weight (dx shift + W zero-padding
                                    + channel contraction folded in)
    g:        (W*Cout, Cout) 0/1 "sum lanes of the same channel" matrix
    gt:       (Cout, W*Cout) its transpose (broadcast channel -> lanes)
    gamma, beta: (1, Cout)
    returns   (N*H, W*Cout)
    """
    NH, wc_in = x.shape
    wc_out = m_top.shape[-1]
    cout = gamma.shape[-1]
    W = wc_out // cout

    # dy = -1 / +1 taps: XLU sublane rotation of the flat slab + border mask
    # (rows wrapping across image boundaries zeroed), instead of slab copies.
    y_in_img = jax.lax.broadcasted_iota(jnp.int32, (NH, wc_in), 0) % H
    up = jnp.where(y_in_img != 0, pltpu.roll(x, shift=1, axis=0), 0.0)
    down = jnp.where(y_in_img != (H - 1),
                     pltpu.roll(x, shift=NH - 1, axis=0), 0.0)

    # Whole 3x3 conv = three accumulating MXU matmuls (one per dy tap).
    y = (jnp.dot(up, m_top, preferred_element_type=jnp.float32)
         + jnp.dot(x, m_mid, preferred_element_type=jnp.float32)
         + jnp.dot(down, m_bot, preferred_element_type=jnp.float32))

    # BatchNorm2d, training-mode batch statistics, single pass (sum + sumsq).
    # The two per-channel folds and the two lane-broadcasts are each a single
    # stacked (2, .) matmul.
    # TODO(synk): E[x^2]-E[x]^2 variance is fine in f32 at these magnitudes;
    # switch to a two-pass form if this block is reused with large means.
    inv_n = 1.0 / float(NH * W)
    csum = jnp.sum(y, axis=0, keepdims=True)                     # (1, W*Cout)
    csq = jnp.sum(y * y, axis=0, keepdims=True)                  # (1, W*Cout)
    stats = jnp.concatenate([csum, csq], axis=0)                 # (2, W*Cout)
    folded = jnp.dot(stats, g, preferred_element_type=jnp.float32) * inv_n
    mean = folded[0:1, :]                                        # (1, Cout)
    ex2 = folded[1:2, :]
    var = ex2 - mean * mean
    scale = gamma * jax.lax.rsqrt(var + EPS)                     # (1, Cout)
    shift = beta - mean * scale
    ss = jnp.dot(jnp.concatenate([scale, shift], axis=0), gt,
                 preferred_element_type=jnp.float32)             # (2, W*Cout)

    return jnp.maximum(y * ss[0:1, :] + ss[1:2, :], 0.0)         # fused BN + ReLU


def _make_kernel(H, W, Cin, Cmid, Cout):
    wc_in = W * Cin
    wc_mid = W * Cmid
    r1 = 3 * wc_in  # row offset of the second conv's bands in the packed buffer

    def kernel(x_ref, mw_ref, g_ref, gt_ref, bn_ref, out_ref):
        x = x_ref[...]                                           # (N*H, W*Cin)
        g = g_ref[...]
        gt = gt_ref[...]
        bn = bn_ref[...]                                         # (4, Cout)

        h1 = _conv_bn_relu_slab(
            x,
            mw_ref[0:wc_in, :],
            mw_ref[wc_in:2 * wc_in, :],
            mw_ref[2 * wc_in:3 * wc_in, :],
            g, gt, bn[0:1, :], bn[1:2, :], H)                    # (N*H, W*Cmid)

        h2 = _conv_bn_relu_slab(
            h1,
            mw_ref[r1:r1 + wc_mid, :],
            mw_ref[r1 + wc_mid:r1 + 2 * wc_mid, :],
            mw_ref[r1 + 2 * wc_mid:r1 + 3 * wc_mid, :],
            g, gt, bn[2:3, :], bn[3:4, :], H)                    # (N*H, W*Cout)

        out_ref[...] = h2                                        # unmasked 128-lane stores

    return kernel


def _band_weights(w, W):
    """PyTorch conv weight (Cout, Cin, 3, 3) -> banded (3*W*Cin, W*Cout) matrix.

    Row index = dy*(W*Cin) + xin*Cin + ci ; col index = xout*Cout + co.
    Encodes the dx shift and the W zero-padding.
    """
    cout, cin = w.shape[0], w.shape[1]
    k = jnp.transpose(w, (2, 3, 1, 0)).astype(jnp.float32)       # (3, 3, Cin, Cout)
    p = np.zeros((3, W, W), np.float32)                          # p[dx, xin, xout]
    for dx in range(3):
        for xo in range(W):
            xi = xo + dx - 1
            if 0 <= xi < W:
                p[dx, xi, xo] = 1.0
    m = jnp.einsum('dax,ydio->yaixo', jnp.asarray(p), k)         # (3, W, Cin, W, Cout)
    return m.reshape(3 * W * cin, W * cout)


def prepare_params(params, W):
    """One-time constant prep (call when weights are set, not per forward)."""
    w1, b1, g1, be1, w2, b2, g2, be2 = params
    del b1, b2  # exactly cancelled by train-mode BatchNorm mean subtraction
    Cout = w1.shape[0]
    m1 = _band_weights(w1, W)                                    # (3*W*Cin,  W*Cmid)
    m2 = _band_weights(w2, W)                                    # (3*W*Cmid, W*Cout)
    mw = jnp.concatenate([m1, m2], axis=0)                       # packed weight buffer
    g = jnp.tile(jnp.eye(Cout, dtype=jnp.float32), (W, 1))       # (W*Cout, Cout)
    gt = g.T                                                     # (Cout, W*Cout)
    bn = jnp.stack([g1, be1, g2, be2], axis=0).astype(jnp.float32)  # (4, Cout)
    return mw, g, gt, bn


@jax.jit
def conv_block_forward(x_nchw, mw, g, gt, bn):
    """Pallas version of ConvBlock.forward. x_nchw: (N, Cin, H, W) float32."""
    N, Cin, H, W = x_nchw.shape
    Cout = g.shape[-1]
    Cmid = (mw.shape[0] - 3 * W * Cin) // (3 * W)

    # NCHW -> lane-dense (N*H, W*Cin) slab (single boundary transpose).
    x = jnp.transpose(x_nchw, (0, 2, 3, 1)).astype(jnp.float32).reshape(N * H, W * Cin)

    vmem = pl.BlockSpec(memory_space=pltpu.MemorySpace.VMEM)
    out_slab = pl.pallas_call(
        _make_kernel(H, W, Cin, Cmid, Cout),
        out_shape=jax.ShapeDtypeStruct((N * H, W * Cout), jnp.float32),
        in_specs=[vmem] * 5,
        out_specs=vmem,
        compiler_params=pltpu.CompilerParams(vmem_limit_bytes=8 * 1024 * 1024),
    )(x, mw, g, gt, bn)

    out_nhwc = out_slab.reshape(N, H, W, Cout)
    return jnp.transpose(out_nhwc, (0, 3, 1, 2))                 # back to NCHW


def reference_forward(x_nchw, params):
    """Pure-JAX reference mirroring the PyTorch module (NCHW)."""
    w1, b1, g1, be1, w2, b2, g2, be2 = params

    def conv_bn_relu(x, w, b, g, be):
        y = jax.lax.conv_general_dilated(
            x, w, window_strides=(1, 1), padding=((1, 1), (1, 1)),
            dimension_numbers=("NCHW", "OIHW", "NCHW"))
        y = y + b[None, :, None, None]
        mean = jnp.mean(y, axis=(0, 2, 3), keepdims=True)
        var = jnp.mean((y - mean) ** 2, axis=(0, 2, 3), keepdims=True)
        y = (y - mean) / jnp.sqrt(var + EPS) * g[None, :, None, None] \
            + be[None, :, None, None]
        return jnp.maximum(y, 0.0)

    h = conv_bn_relu(x_nchw, w1, b1, g1, be1)
    return conv_bn_relu(h, w2, b2, g2, be2)


if __name__ == "__main__":
    key = jax.random.PRNGKey(0)
    ks = jax.random.split(key, 9)
    N, Cin, Cout, H, W = 2, 4, 8, 16, 16   # ch_in=4, ch_out=8

    x = jax.random.normal(ks[0], (N, Cin, H, W), jnp.float32)
    w1 = 0.2 * jax.random.normal(ks[1], (Cout, Cin, 3, 3), jnp.float32)
    b1 = 0.1 * jax.random.normal(ks[2], (Cout,), jnp.float32)
    g1 = 1.0 + 0.1 * jax.random.normal(ks[3], (Cout,), jnp.float32)
    be1 = 0.1 * jax.random.normal(ks[4], (Cout,), jnp.float32)
    w2 = 0.2 * jax.random.normal(ks[5], (Cout, Cout, 3, 3), jnp.float32)
    b2 = 0.1 * jax.random.normal(ks[6], (Cout,), jnp.float32)
    g2 = 1.0 + 0.1 * jax.random.normal(ks[7], (Cout,), jnp.float32)
    be2 = 0.1 * jax.random.normal(ks[8], (Cout,), jnp.float32)
    params = (w1, b1, g1, be1, w2, b2, g2, be2)

    prepped = prepare_params(params, W)   # one-time weight/constant prep
    out = jax.block_until_ready(conv_block_forward(x, *prepped))
    ref = jax.block_until_ready(reference_forward(x, params))

    assert out.shape == (N, Cout, H, W), out.shape
    err = float(jnp.max(jnp.abs(out - ref)))
    assert err < 2e-3, f"max abs err {err}"
    print("KERNEL_OK")
</pallas_src>

<mosaic_0001>
module attributes {stable_mosaic.version = 11 : i64} {
  func.func @kernel(%arg0: memref<32x64xf32, #tpu.memory_space<vmem>>, %arg1: memref<576x128xf32, #tpu.memory_space<vmem>>, %arg2: memref<128x8xf32, #tpu.memory_space<vmem>>, %arg3: memref<8x128xf32, #tpu.memory_space<vmem>>, %arg4: memref<4x8xf32, #tpu.memory_space<vmem>>, %arg5: memref<32x128xf32, #tpu.memory_space<vmem>>) attributes {dimension_semantics = [], scalar_prefetch = 0 : i64, scratch_operands = 0 : i64, tpu.core_type = #tpu.core_type<tc>} {
    %c0 = arith.constant 0 : index
    %c0_0 = arith.constant 0 : index
    %0 = vector.load %arg0[%c0, %c0_0] : memref<32x64xf32, #tpu.memory_space<vmem>>, vector<32x64xf32>
    %c0_1 = arith.constant 0 : index
    %c0_2 = arith.constant 0 : index
    %1 = vector.load %arg2[%c0_1, %c0_2] : memref<128x8xf32, #tpu.memory_space<vmem>>, vector<128x8xf32>
    %c0_3 = arith.constant 0 : index
    %c0_4 = arith.constant 0 : index
    %2 = vector.load %arg3[%c0_3, %c0_4] : memref<8x128xf32, #tpu.memory_space<vmem>>, vector<8x128xf32>
    %c0_5 = arith.constant 0 : index
    %c0_6 = arith.constant 0 : index
    %3 = vector.load %arg4[%c0_5, %c0_6] : memref<4x8xf32, #tpu.memory_space<vmem>>, vector<4x8xf32>
    %c0_7 = arith.constant 0 : index
    %c0_8 = arith.constant 0 : index
    %4 = vector.load %arg1[%c0_7, %c0_8] : memref<576x128xf32, #tpu.memory_space<vmem>>, vector<64x128xf32>
    %c64 = arith.constant 64 : index
    %c0_9 = arith.constant 0 : index
    %5 = vector.load %arg1[%c64, %c0_9] : memref<576x128xf32, #tpu.memory_space<vmem>>, vector<64x128xf32>
    %c128 = arith.constant 128 : index
    %c0_10 = arith.constant 0 : index
    %6 = vector.load %arg1[%c128, %c0_10] : memref<576x128xf32, #tpu.memory_space<vmem>>, vector<64x128xf32>
    %7 = vector.extract_strided_slice %3 {offsets = [0, 0], sizes = [1, 8], strides = [1, 1]} : vector<4x8xf32> to vector<1x8xf32>
    %8 = vector.extract_strided_slice %3 {offsets = [1, 0], sizes = [1, 8], strides = [1, 1]} : vector<4x8xf32> to vector<1x8xf32>
    %9 = tpu.iota {dimensions = array<i32: 0>} : vector<32x64xi32>
    %c16_i32 = arith.constant 16 : i32
    %c0_i32 = arith.constant 0 : i32
    %10 = arith.cmpi eq, %c16_i32, %c0_i32 : i32
    %c1_i32 = arith.constant 1 : i32
    %11 = arith.select %10, %c1_i32, %c16_i32 : i32
    %12 = vector.broadcast %11 : i32 to vector<32x64xi32>
    %13 = arith.remsi %9, %12 : vector<32x64xi32>
    %c0_i32_11 = arith.constant 0 : i32
    %14 = vector.broadcast %c0_i32_11 : i32 to vector<32x64xi32>
    %15 = arith.cmpi ne, %13, %14 : vector<32x64xi32>
    %c0_i32_12 = arith.constant 0 : i32
    %16 = vector.broadcast %c0_i32_12 : i32 to vector<32x64xi32>
    %17 = arith.cmpi slt, %13, %16 : vector<32x64xi32>
    %c0_i32_13 = arith.constant 0 : i32
    %18 = arith.cmpi slt, %11, %c0_i32_13 : i32
    %19 = vector.broadcast %18 : i1 to vector<32x64xi1>
    %20 = vector.broadcast %19 : vector<32x64xi1> to vector<32x64xi1>
    %21 = arith.xori %17, %20 : vector<32x64xi1>
    %22 = arith.andi %21, %15 : vector<32x64xi1>
    %23 = vector.broadcast %11 : i32 to vector<32x64xi32>
    %24 = arith.addi %13, %23 : vector<32x64xi32>
    %25 = arith.select %22, %24, %13 : vector<32x64xi1>, vector<32x64xi32>
    %c0_i32_14 = arith.constant 0 : i32
    %26 = vector.broadcast %c0_i32_14 : i32 to vector<32x64xi32>
    %27 = arith.cmpi ne, %25, %26 : vector<32x64xi32>
    %c1_i32_15 = arith.constant 1 : i32
    %28 = tpu.dynamic_rotate %0 by %c1_i32_15 dim 0 : vector<32x64xf32>, i32 -> vector<32x64xf32>
    %cst = arith.constant 0.000000e+00 : f32
    %29 = vector.broadcast %cst : f32 to vector<32x64xf32>
    %30 = arith.select %27, %28, %29 : vector<32x64xi1>, vector<32x64xf32>
    %c15_i32 = arith.constant 15 : i32
    %31 = vector.broadcast %c15_i32 : i32 to vector<32x64xi32>
    %32 = arith.cmpi ne, %25, %31 : vector<32x64xi32>
    %c31_i32 = arith.constant 31 : i32
    %33 = tpu.dynamic_rotate %0 by %c31_i32 dim 0 : vector<32x64xf32>, i32 -> vector<32x64xf32>
    %cst_16 = arith.constant 0.000000e+00 : f32
    %34 = vector.broadcast %cst_16 : f32 to vector<32x64xf32>
    %35 = arith.select %32, %33, %34 : vector<32x64xi1>, vector<32x64xf32>
    %cst_17 = arith.constant dense<0.000000e+00> : vector<32x128xf32>
    %36 = tpu.matmul %30, %4, %cst_17 {dimension_numbers = #tpu.dot_dimension_numbers<[1], [0], [0], [1], [0, 0, 1, 1], [], []>} : vector<32x64xf32>, vector<64x128xf32>, vector<32x128xf32> -> vector<32x128xf32>
    %cst_18 = arith.constant dense<0.000000e+00> : vector<32x128xf32>
    %37 = tpu.matmul %0, %5, %cst_18 {dimension_numbers = #tpu.dot_dimension_numbers<[1], [0], [0], [1], [0, 0, 1, 1], [], []>} : vector<32x64xf32>, vector<64x128xf32>, vector<32x128xf32> -> vector<32x128xf32>
    %38 = arith.addf %36, %37 : vector<32x128xf32>
    %cst_19 = arith.constant dense<0.000000e+00> : vector<32x128xf32>
    %39 = tpu.matmul %35, %6, %cst_19 {dimension_numbers = #tpu.dot_dimension_numbers<[1], [0], [0], [1], [0, 0, 1, 1], [], []>} : vector<32x64xf32>, vector<64x128xf32>, vector<32x128xf32> -> vector<32x128xf32>
    %40 = arith.addf %38, %39 : vector<32x128xf32>
    %cst_20 = arith.constant dense<0.000000e+00> : vector<128xf32>
    %41 = vector.multi_reduction <add>, %40, %cst_20 [0] : vector<32x128xf32> to vector<128xf32>
    %42 = vector.shape_cast %41 : vector<128xf32> to vector<1x128xf32>
    %43 = arith.mulf %40, %40 : vector<32x128xf32>
    %cst_21 = arith.constant dense<0.000000e+00> : vector<128xf32>
    %44 = vector.multi_reduction <add>, %43, %cst_21 [0] : vector<32x128xf32> to vector<128xf32>
    %45 = vector.shape_cast %44 : vector<128xf32> to vector<1x128xf32>
    %46 = tpu.concatenate %42, %45 in 0 : vector<1x128xf32>, vector<1x128xf32> -> vector<2x128xf32>
    %cst_22 = arith.constant dense<0.000000e+00> : vector<2x8xf32>
    %47 = tpu.matmul %46, %1, %cst_22 {dimension_numbers = #tpu.dot_dimension_numbers<[1], [0], [0], [1], [0, 0, 1, 1], [], []>} : vector<2x128xf32>, vector<128x8xf32>, vector<2x8xf32> -> vector<2x8xf32>
    %cst_23 = arith.constant 0.001953125 : f32
    %48 = vector.broadcast %cst_23 : f32 to vector<2x8xf32>
    %49 = arith.mulf %47, %48 : vector<2x8xf32>
    %50 = vector.extract_strided_slice %49 {offsets = [0, 0], sizes = [1, 8], strides = [1, 1]} : vector<2x8xf32> to vector<1x8xf32>
    %51 = vector.extract_strided_slice %49 {offsets = [1, 0], sizes = [1, 8], strides = [1, 1]} : vector<2x8xf32> to vector<1x8xf32>
    %52 = arith.mulf %50, %50 : vector<1x8xf32>
    %53 = arith.subf %51, %52 : vector<1x8xf32>
    %cst_24 = arith.constant 9.99999974E-6 : f32
    %54 = vector.broadcast %cst_24 : f32 to vector<1x8xf32>
    %55 = arith.addf %53, %54 : vector<1x8xf32>
    %56 = math.rsqrt %55 : vector<1x8xf32>
    %57 = arith.mulf %7, %56 : vector<1x8xf32>
    %58 = arith.mulf %50, %57 : vector<1x8xf32>
    %59 = arith.subf %8, %58 : vector<1x8xf32>
    %60 = tpu.concatenate %57, %59 in 0 : vector<1x8xf32>, vector<1x8xf32> -> vector<2x8xf32>
    %cst_25 = arith.constant dense<0.000000e+00> : vector<2x128xf32>
    %61 = tpu.matmul %60, %2, %cst_25 {dimension_numbers = #tpu.dot_dimension_numbers<[1], [0], [0], [1], [0, 0, 1, 1], [], []>} : vector<2x8xf32>, vector<8x128xf32>, vector<2x128xf32> -> vector<2x128xf32>
    %62 = vector.extract_strided_slice %61 {offsets = [0, 0], sizes = [1, 128], strides = [1, 1]} : vector<2x128xf32> to vector<1x128xf32>
    %63 = vector.broadcast %62 : vector<1x128xf32> to vector<32x128xf32>
    %64 = arith.mulf %40, %63 : vector<32x128xf32>
    %65 = vector.extract_strided_slice %61 {offsets = [1, 0], sizes = [1, 128], strides = [1, 1]} : vector<2x128xf32> to vector<1x128xf32>
    %66 = vector.broadcast %65 : vector<1x128xf32> to vector<32x128xf32>
    %67 = arith.addf %64, %66 : vector<32x128xf32>
    %cst_26 = arith.constant 0.000000e+00 : f32
    %68 = vector.broadcast %cst_26 : f32 to vector<32x128xf32>
    %69 = arith.maximumf %67, %68 : vector<32x128xf32>
    %c192 = arith.constant 192 : index
    %c0_27 = arith.constant 0 : index
    %70 = vector.load %arg1[%c192, %c0_27] : memref<576x128xf32, #tpu.memory_space<vmem>>, vector<128x128xf32>
    %c320 = arith.constant 320 : index
    %c0_28 = arith.constant 0 : index
    %71 = vector.load %arg1[%c320, %c0_28] : memref<576x128xf32, #tpu.memory_space<vmem>>, vector<128x128xf32>
    %c448 = arith.constant 448 : index
    %c0_29 = arith.constant 0 : index
    %72 = vector.load %arg1[%c448, %c0_29] : memref<576x128xf32, #tpu.memory_space<vmem>>, vector<128x128xf32>
    %73 = vector.extract_strided_slice %3 {offsets = [2, 0], sizes = [1, 8], strides = [1, 1]} : vector<4x8xf32> to vector<1x8xf32>
    %74 = vector.extract_strided_slice %3 {offsets = [3, 0], sizes = [1, 8], strides = [1, 1]} : vector<4x8xf32> to vector<1x8xf32>
    %75 = tpu.iota {dimensions = array<i32: 0>} : vector<32x128xi32>
    %c16_i32_30 = arith.constant 16 : i32
    %c0_i32_31 = arith.constant 0 : i32
    %76 = arith.cmpi eq, %c16_i32_30, %c0_i32_31 : i32
    %c1_i32_32 = arith.constant 1 : i32
    %77 = arith.select %76, %c1_i32_32, %c16_i32_30 : i32
    %78 = vector.broadcast %77 : i32 to vector<32x128xi32>
    %79 = arith.remsi %75, %78 : vector<32x128xi32>
    %c0_i32_33 = arith.constant 0 : i32
    %80 = vector.broadcast %c0_i32_33 : i32 to vector<32x128xi32>
    %81 = arith.cmpi ne, %79, %80 : vector<32x128xi32>
    %c0_i32_34 = arith.constant 0 : i32
    %82 = vector.broadcast %c0_i32_34 : i32 to vector<32x128xi32>
    %83 = arith.cmpi slt, %79, %82 : vector<32x128xi32>
    %c0_i32_35 = arith.constant 0 : i32
    %84 = arith.cmpi slt, %77, %c0_i32_35 : i32
    %85 = vector.broadcast %84 : i1 to vector<32x128xi1>
    %86 = vector.broadcast %85 : vector<32x128xi1> to vector<32x128xi1>
    %87 = arith.xori %83, %86 : vector<32x128xi1>
    %88 = arith.andi %87, %81 : vector<32x128xi1>
    %89 = vector.broadcast %77 : i32 to vector<32x128xi32>
    %90 = arith.addi %79, %89 : vector<32x128xi32>
    %91 = arith.select %88, %90, %79 : vector<32x128xi1>, vector<32x128xi32>
    %c0_i32_36 = arith.constant 0 : i32
    %92 = vector.broadcast %c0_i32_36 : i32 to vector<32x128xi32>
    %93 = arith.cmpi ne, %91, %92 : vector<32x128xi32>
    %c1_i32_37 = arith.constant 1 : i32
    %94 = tpu.dynamic_rotate %69 by %c1_i32_37 dim 0 : vector<32x128xf32>, i32 -> vector<32x128xf32>
    %cst_38 = arith.constant 0.000000e+00 : f32
    %95 = vector.broadcast %cst_38 : f32 to vector<32x128xf32>
    %96 = arith.select %93, %94, %95 : vector<32x128xi1>, vector<32x128xf32>
    %c15_i32_39 = arith.constant 15 : i32
    %97 = vector.broadcast %c15_i32_39 : i32 to vector<32x128xi32>
    %98 = arith.cmpi ne, %91, %97 : vector<32x128xi32>
    %c31_i32_40 = arith.constant 31 : i32
    %99 = tpu.dynamic_rotate %69 by %c31_i32_40 dim 0 : vector<32x128xf32>, i32 -> vector<32x128xf32>
    %cst_41 = arith.constant 0.000000e+00 : f32
    %100 = vector.broadcast %cst_41 : f32 to vector<32x128xf32>
    %101 = arith.select %98, %99, %100 : vector<32x128xi1>, vector<32x128xf32>
    %cst_42 = arith.constant dense<0.000000e+00> : vector<32x128xf32>
    %102 = tpu.matmul %96, %70, %cst_42 {dimension_numbers = #tpu.dot_dimension_numbers<[1], [0], [0], [1], [0, 0, 1, 1], [], []>} : vector<32x128xf32>, vector<128x128xf32>, vector<32x128xf32> -> vector<32x128xf32>
    %cst_43 = arith.constant dense<0.000000e+00> : vector<32x128xf32>
    %103 = tpu.matmul %69, %71, %cst_43 {dimension_numbers = #tpu.dot_dimension_numbers<[1], [0], [0], [1], [0, 0, 1, 1], [], []>} : vector<32x128xf32>, vector<128x128xf32>, vector<32x128xf32> -> vector<32x128xf32>
    %104 = arith.addf %102, %103 : vector<32x128xf32>
    %cst_44 = arith.constant dense<0.000000e+00> : vector<32x128xf32>
    %105 = tpu.matmul %101, %72, %cst_44 {dimension_numbers = #tpu.dot_dimension_numbers<[1], [0], [0], [1], [0, 0, 1, 1], [], []>} : vector<32x128xf32>, vector<128x128xf32>, vector<32x128xf32> -> vector<32x128xf32>
    %106 = arith.addf %104, %105 : vector<32x128xf32>
    %cst_45 = arith.constant dense<0.000000e+00> : vector<128xf32>
    %107 = vector.multi_reduction <add>, %106, %cst_45 [0] : vector<32x128xf32> to vector<128xf32>
    %108 = vector.shape_cast %107 : vector<128xf32> to vector<1x128xf32>
    %109 = arith.mulf %106, %106 : vector<32x128xf32>
    %cst_46 = arith.constant dense<0.000000e+00> : vector<128xf32>
    %110 = vector.multi_reduction <add>, %109, %cst_46 [0] : vector<32x128xf32> to vector<128xf32>
    %111 = vector.shape_cast %110 : vector<128xf32> to vector<1x128xf32>
    %112 = tpu.concatenate %108, %111 in 0 : vector<1x128xf32>, vector<1x128xf32> -> vector<2x128xf32>
    %cst_47 = arith.constant dense<0.000000e+00> : vector<2x8xf32>
    %113 = tpu.matmul %112, %1, %cst_47 {dimension_numbers = #tpu.dot_dimension_numbers<[1], [0], [0], [1], [0, 0, 1, 1], [], []>} : vector<2x128xf32>, vector<128x8xf32>, vector<2x8xf32> -> vector<2x8xf32>
    %cst_48 = arith.constant 0.001953125 : f32
    %114 = vector.broadcast %cst_48 : f32 to vector<2x8xf32>
    %115 = arith.mulf %113, %114 : vector<2x8xf32>
    %116 = vector.extract_strided_slice %115 {offsets = [0, 0], sizes = [1, 8], strides = [1, 1]} : vector<2x8xf32> to vector<1x8xf32>
    %117 = vector.extract_strided_slice %115 {offsets = [1, 0], sizes = [1, 8], strides = [1, 1]} : vector<2x8xf32> to vector<1x8xf32>
    %118 = arith.mulf %116, %116 : vector<1x8xf32>
    %119 = arith.subf %117, %118 : vector<1x8xf32>
    %cst_49 = arith.constant 9.99999974E-6 : f32
    %120 = vector.broadcast %cst_49 : f32 to vector<1x8xf32>
    %121 = arith.addf %119, %120 : vector<1x8xf32>
    %122 = math.rsqrt %121 : vector<1x8xf32>
    %123 = arith.mulf %73, %122 : vector<1x8xf32>
    %124 = arith.mulf %116, %123 : vector<1x8xf32>
    %125 = arith.subf %74, %124 : vector<1x8xf32>
    %126 = tpu.concatenate %123, %125 in 0 : vector<1x8xf32>, vector<1x8xf32> -> vector<2x8xf32>
    %cst_50 = arith.constant dense<0.000000e+00> : vector<2x128xf32>
    %127 = tpu.matmul %126, %2, %cst_50 {dimension_numbers = #tpu.dot_dimension_numbers<[1], [0], [0], [1], [0, 0, 1, 1], [], []>} : vector<2x8xf32>, vector<8x128xf32>, vector<2x128xf32> -> vector<2x128xf32>
    %128 = vector.extract_strided_slice %127 {offsets = [0, 0], sizes = [1, 128], strides = [1, 1]} : vector<2x128xf32> to vector<1x128xf32>
    %129 = vector.broadcast %128 : vector<1x128xf32> to vector<32x128xf32>
    %130 = arith.mulf %106, %129 : vector<32x128xf32>
    %131 = vector.extract_strided_slice %127 {offsets = [1, 0], sizes = [1, 128], strides = [1, 1]} : vector<2x128xf32> to vector<1x128xf32>
    %132 = vector.broadcast %131 : vector<1x128xf32> to vector<32x128xf32>
    %133 = arith.addf %130, %132 : vector<32x128xf32>
    %cst_51 = arith.constant 0.000000e+00 : f32
    %134 = vector.broadcast %cst_51 : f32 to vector<32x128xf32>
    %135 = arith.maximumf %133, %134 : vector<32x128xf32>
    %c0_52 = arith.constant 0 : index
    %c0_53 = arith.constant 0 : index
    %136 = vector.load %arg5[%c0_52, %c0_53] : memref<32x128xf32, #tpu.memory_space<vmem>>, vector<32x128xf32>
    tpu.vector_store %arg5[%c0_52, %c0_53], %135 {strides = array<i32>} : memref<32x128xf32, #tpu.memory_space<vmem>>, vector<32x128xf32>,
    return
  }
}

</mosaic_0001>

<llo_original>
// kernel: conv_block_forward.1
$region0: #{conv_block_forward.1}
  #allocation0 [shape = 'u32[]', space=smem, size = 0x4, offset = 0x4, fixed_abs, tag = 'smem constant byte address 0x4 - core index']
  #allocation1 [shape = 'u32[144,128]{1,0:T(1,128)}', space=vmem, size = 0x12000, scoped, tag = 'internal scratch']
  %s0 = inlined_call_operand.vmem [shape: f32[32,64], index: 0, kind: input, shape index: {}]
  %s1 = inlined_call_operand.vmem [shape: f32[576,128], index: 1, kind: input, shape index: {}]
  %s2 = inlined_call_operand.vmem [shape: f32[128,8], index: 2, kind: input, shape index: {}]
  %s3 = inlined_call_operand.vmem [shape: f32[8,128], index: 3, kind: input, shape index: {}]
  %s4 = inlined_call_operand.vmem [shape: f32[4,8], index: 4, kind: input, shape index: {}]
  %s5 = inlined_call_operand.vmem [shape: f32[32,128], index: 5, kind: output, shape index: {}]
  %s6 = sld [smem:[#allocation0]]
  $region30: #{conv_block_forward.1} parent=0
    _
  %s8 = ssub.s32 1, %s6
  %s9 = scalar_select 0, %s8, %s6
  // Predicated region
  $region2: #{conv_block_forward.1} parent=0 // pred_check
    _
  $region3: #{conv_block_forward.1} parent=0 // pred_check_branch
    %11 = sbr.rel (0) target = $region5
  $region4: #{conv_block_forward.1} parent=0 // pred_region
    _
  $region5: #{conv_block_forward.1} parent=0 // pred_fallthru
    _
  // Predicated region
  $region6: #{conv_block_forward.1} parent=0 // pred_check
    _
  $region7: #{conv_block_forward.1} parent=0 // pred_check_branch
    %13 = sbr.rel (0) target = $region9
  $region8: #{conv_block_forward.1} parent=0 // pred_region
    _
  $region9: #{conv_block_forward.1} parent=0 // pred_fallthru
    _
  // Predicated region
  $region10: #{conv_block_forward.1} parent=0 // pred_check
    _
  $region11: #{conv_block_forward.1} parent=0 // pred_check_branch
    %15 = sbr.rel (0) target = $region13
  $region12: #{conv_block_forward.1} parent=0 // pred_region
    _
  $region13: #{conv_block_forward.1} parent=0 // pred_fallthru
    _
  // Predicated region
  $region14: #{conv_block_forward.1} parent=0 // pred_check
    _
  $region15: #{conv_block_forward.1} parent=0 // pred_check_branch
    %17 = sbr.rel (0) target = $region17
  $region16: #{conv_block_forward.1} parent=0 // pred_region
    _
  $region17: #{conv_block_forward.1} parent=0 // pred_fallthru
    _
  // Predicated region
  $region18: #{conv_block_forward.1} parent=0 // pred_check
    _
  $region19: #{conv_block_forward.1} parent=0 // pred_check_branch
    %19 = sbr.rel (0) target = $region21
  $region20: #{conv_block_forward.1} parent=0 // pred_region
    _
  $region21: #{conv_block_forward.1} parent=0 // pred_fallthru
    _
  %v20 = vld [vmem:[%s0] sm:$0xff]
  %v21 = vld [vmem:[%s0 + $0x8] sm:$0xff]
  %v22 = vld [vmem:[%s0 + $0x10] sm:$0xff]
  %v23 = vld [vmem:[%s0 + $0x18] sm:$0xff]
  %v24 = vld [vmem:[%s2] sm:$0xff]
  %v25 = vld [vmem:[%s2 + $0x8] sm:$0xff]
  %v26 = vld [vmem:[%s2 + $0x10] sm:$0xff]
  %v27 = vld [vmem:[%s2 + $0x18] sm:$0xff]
  %v28 = vld [vmem:[%s2 + $0x20] sm:$0xff]
  %v29 = vld [vmem:[%s2 + $0x28] sm:$0xff]
  %v30 = vld [vmem:[%s2 + $0x30] sm:$0xff]
  %v31 = vld [vmem:[%s2 + $0x38] sm:$0xff]
  %v32 = vld [vmem:[%s2 + $0x40] sm:$0xff]
  %v33 = vld [vmem:[%s2 + $0x48] sm:$0xff]
  %v34 = vld [vmem:[%s2 + $0x50] sm:$0xff]
  %v35 = vld [vmem:[%s2 + $0x58] sm:$0xff]
  %v36 = vld [vmem:[%s2 + $0x60] sm:$0xff]
  %v37 = vld [vmem:[%s2 + $0x68] sm:$0xff]
  %v38 = vld [vmem:[%s2 + $0x70] sm:$0xff]
  %v39 = vld [vmem:[%s2 + $0x78] sm:$0xff]
  %v40 = vld [vmem:[%s3] sm:$0xff]
  %v41 = vld [vmem:[%s4] sm:$0xf]
  %v42 = vld [vmem:[%s1] sm:$0xff]
  %v43 = vld [vmem:[%s1 + $0x8] sm:$0xff]
  %v44 = vld [vmem:[%s1 + $0x10] sm:$0xff]
  %v45 = vld [vmem:[%s1 + $0x18] sm:$0xff]
  %v46 = vld [vmem:[%s1 + $0x20] sm:$0xff]
  %v47 = vld [vmem:[%s1 + $0x28] sm:$0xff]
  %v48 = vld [vmem:[%s1 + $0x30] sm:$0xff]
  %v49 = vld [vmem:[%s1 + $0x38] sm:$0xff]
  %v50 = vld [vmem:[%s1 + $0x40] sm:$0xff]
  %v51 = vld [vmem:[%s1 + $0x48] sm:$0xff]
  %v52 = vld [vmem:[%s1 + $0x50] sm:$0xff]
  %v53 = vld [vmem:[%s1 + $0x58] sm:$0xff]
  %v54 = vld [vmem:[%s1 + $0x60] sm:$0xff]
  %v55 = vld [vmem:[%s1 + $0x68] sm:$0xff]
  %v56 = vld [vmem:[%s1 + $0x70] sm:$0xff]
  %v57 = vld [vmem:[%s1 + $0x78] sm:$0xff]
  %v58 = vld [vmem:[%s1 + $0x80] sm:$0xff]
  %v59 = vld [vmem:[%s1 + $0x88] sm:$0xff]
  %v60 = vld [vmem:[%s1 + $0x90] sm:$0xff]
  %v61 = vld [vmem:[%s1 + $0x98] sm:$0xff]
  %v62 = vld [vmem:[%s1 + $0xa0] sm:$0xff]
  %v63 = vld [vmem:[%s1 + $0xa8] sm:$0xff]
  %v64 = vld [vmem:[%s1 + $0xb0] sm:$0xff]
  %v65 = vld [vmem:[%s1 + $0xb8] sm:$0xff]
  %v66 = vlaneseq
  %v67 = vshrl.u32 %v66, 7
  %v68 = vadd.s32 %v67, 8
  %v69 = vadd.s32 %v67, 16
  %v70 = vadd.s32 %v67, 24
  %vm71 = vcmp.lt.s32.totalorder %v67, 0
  %v72 = vsub.s32 0, %v67
  %v73 = vsel %vm71, %v72, %v67
  %v74 = vshrl.u32 %v73, 4
  %v75 = vand.u32 %v73, 15
  %v76 = vsub.s32 0, %v75
  %v77 = vsel %vm71, %v76, %v75
  %vm78 = vcmp.lt.s32.totalorder %v68, 0
  %v79 = vsub.s32 0, %v68
  %v80 = vsel %vm78, %v79, %v68
  %v81 = vshrl.u32 %v80, 4
  %v82 = vand.u32 %v80, 15
  %v83 = vsub.s32 0, %v82
  %v84 = vsel %vm78, %v83, %v82
  %vm85 = vcmp.lt.s32.totalorder %v69, 0
  %v86 = vsub.s32 0, %v69
  %v87 = vsel %vm85, %v86, %v69
  %v88 = vshrl.u32 %v87, 4
  %v89 = vand.u32 %v87, 15
  %v90 = vsub.s32 0, %v89
  %v91 = vsel %vm85, %v90, %v89
  %vm92 = vcmp.lt.s32.totalorder %v70, 0
  %v93 = vsub.s32 0, %v70
  %v94 = vsel %vm92, %v93, %v70
  %v95 = vshrl.u32 %v94, 4
  %v96 = vand.u32 %v94, 15
  %v97 = vsub.s32 0, %v96
  %v98 = vsel %vm92, %v97, %v96
  %vm99 = vcmp.ne.s32.totalorder %v77, 0
  %vm100 = vcmp.ne.s32.totalorder %v84, 0
  %vm101 = vcmp.ne.s32.totalorder %v91, 0
  %vm102 = vcmp.ne.s32.totalorder %v98, 0
  %vm103 = vcmp.lt.s32.totalorder %v77, 0
  %vm104 = vcmp.lt.s32.totalorder %v84, 0
  %vm105 = vcmp.lt.s32.totalorder %v91, 0
  %vm106 = vcmp.lt.s32.totalorder %v98, 0
  %vm107 = vmand %vm103, %vm99
  %vm108 = vmand %vm104, %vm100
  %vm109 = vmand %vm105, %vm101
  %vm110 = vmand %vm106, %vm102
  %v111 = vadd.s32 %v77, 16
  %v112 = vadd.s32 %v84, 16
  %v113 = vadd.s32 %v91, 16
  %v114 = vadd.s32 %v98, 16
  %v115 = vsel %vm107, %v111, %v77
  %v116 = vsel %vm108, %v112, %v84
  %v117 = vsel %vm109, %v113, %v91
  %v118 = vsel %vm110, %v114, %v98
  %vm119 = vcmp.ne.s32.totalorder %v115, 0
  %vm120 = vcmp.ne.s32.totalorder %v116, 0
  %vm121 = vcmp.ne.s32.totalorder %v117, 0
  %vm122 = vcmp.ne.s32.totalorder %v118, 0
  %v123 = vrot.slane %v20, 7
  %v124 = vrot.slane %v21, 7
  %v125 = vrot.slane %v22, 7
  %v126 = vrot.slane %v23, 7
  %vm127 = vcmp.lt.s32.totalorder %v67, 1
  %v128 = vsel %vm127, %v125, %v126
  %v129 = vsel %vm127, %v124, %v125
  %v130 = vsel %vm127, %v123, %v124
  %v131 = vsel %vm127, %v126, %v123
  %v132 = vsel %vm119, %v131, 0.0
  %v133 = vsel %vm120, %v130, 0.0
  %v134 = vsel %vm121, %v129, 0.0
  %v135 = vsel %vm122, %v128, 0.0
  %vm136 = vcmp.ne.s32.totalorder %v115, 15
  %vm137 = vcmp.ne.s32.totalorder %v116, 15
  %vm138 = vcmp.ne.s32.totalorder %v117, 15
  %vm139 = vcmp.ne.s32.totalorder %v118, 15
  %v140 = vrot.slane %v20, 1
  %v141 = vrot.slane %v21, 1
  %v142 = vrot.slane %v22, 1
  %v143 = vrot.slane %v23, 1
  %vm144 = vcmp.lt.s32.totalorder %v67, 7
  %v145 = vsel %vm144, %v142, %v143
  %v146 = vsel %vm144, %v141, %v142
  %v147 = vsel %vm144, %v140, %v141
  %v148 = vsel %vm144, %v143, %v140
  %v149 = vsel %vm136, %v147, 0.0
  %v150 = vsel %vm137, %v146, 0.0
  %v151 = vsel %vm138, %v145, 0.0
  %v152 = vsel %vm139, %v148, 0.0
  %vm153 = vcmask 523264
  %v155 = vsel %vm153, %v20, 0
  %v158 = vsel %vm153, %v21, 0
  %v161 = vsel %vm153, %v22, 0
  %v164 = vsel %vm153, %v23, 0
  %166 = vmatprep.subr.mxu0 0.0
  %167 = vmatpush1.msra.mxu0 %v50
  %168 = vmatprep.subr.mxu0 0.0
  %169 = vmatpush1.msra.mxu0 %v51
  %170 = vmatprep.subr.mxu0 0.0
  %171 = vmatpush1.msra.mxu0 %v52
  %172 = vmatprep.subr.mxu0 0.0
  %173 = vmatpush1.msra.mxu0 %v53
  %174 = vmatprep.subr.mxu0 0.0
  %175 = vmatpush1.msra.mxu0 %v54
  %176 = vmatprep.subr.mxu0 0.0
  %177 = vmatpush1.msra.mxu0 %v55
  %178 = vmatprep.subr.mxu0 0.0
  %179 = vmatpush1.msra.mxu0 %v56
  %180 = vmatprep.subr.mxu0 0.0
  %181 = vmatpush1.msra.mxu0 %v57
  %182 = vmatprep.subr.mxu0 0.0
  %183 = vmatpush1.msra.mxu0 0.0
  %184 = vmatprep.subr.mxu0 0.0
  %185 = vmatpush1.msra.mxu0 0.0
  %186 = vmatprep.subr.mxu0 0.0
  %187 = vmatpush1.msra.mxu0 0.0
  %188 = vmatprep.subr.mxu0 0.0
  %189 = vmatpush1.msra.mxu0 0.0
  %190 = vmatprep.subr.mxu0 0.0
  %191 = vmatpush1.msra.mxu0 0.0
  %192 = vmatprep.subr.mxu0 0.0
  %193 = vmatpush1.msra.mxu0 0.0
  %194 = vmatprep.subr.mxu0 0.0
  %195 = vmatpush1.msra.mxu0 0.0
  %196 = vmatprep.subr.mxu0 0.0
  %197 = vmatpush1.msra.mxu0 0.0
  %198 = vmatprep.subr.mxu0 0.0
  %199 = vmatpush1.msra.mxu0 0.0
  %200 = vmatprep.subr.mxu0 0.0
  %201 = vmatpush1.msra.mxu0 0.0
  %202 = vmatprep.subr.mxu0 0.0
  %203 = vmatpush1.msra.mxu0 0.0
  %204 = vmatprep.subr.mxu0 0.0
  %205 = vmatpush1.msra.mxu0 0.0
  %206 = vmatprep.subr.mxu0 0.0
  %207 = vmatpush1.msra.mxu0 0.0
  %208 = vmatprep.subr.mxu0 0.0
  %209 = vmatpush1.msra.mxu0 0.0
  %210 = vmatprep.subr.mxu0 0.0
  %211 = vmatpush1.msra.mxu0 0.0
  %212 = vmatprep.subr.mxu0 0.0
  %213 = vmatpush1.msra.mxu0 0.0
  %214 = vmatprep.subr.mxu0 0.0
  %215 = vmatpush1.msra.mxu0 0.0
  %216 = vmatprep.subr.mxu0 0.0
  %217 = vmatpush1.msra.mxu0 0.0
  %218 = vmatprep.subr.mxu0 0.0
  %219 = vmatpush1.msra.mxu0 0.0
  %220 = vmatprep.subr.mxu0 0.0
  %221 = vmatpush1.msra.mxu0 0.0
  %222 = vmatprep.subr.mxu0 0.0
  %223 = vmatpush1.msra.mxu0 0.0
  %224 = vmatprep.subr.mxu0 0.0
  %225 = vmatpush1.msra.mxu0 0.0
  %226 = vmatprep.subr.mxu0 0.0
  %227 = vmatpush1.msra.mxu0 0.0
  %228 = vmatprep.subr.mxu0 0.0
  %229 = vmatpush1.msra.mxu0 0.0
  %230 = vmatprep.mubr.f32.mxu0 0.0
  %231 = vmatmul.mubr.f32.gmra.mrb[0].mxu0 %v155
  %v232 = vpop.f32.mrb[0].mxu0
  %v233 = vadd.f32 0.0, %v232
  %v234 = vpop.f32.mrb[0].mxu0
  %235 = vmatprep.mubr.f32.mxu0 0.0
  %236 = vmatmul.mubr.f32.gmra.mrb[0].mxu0 %v158
  %v237 = vpop.f32.mrb[0].mxu0
  %v238 = vadd.f32 0.0, %v237
  %v239 = vpop.f32.mrb[0].mxu0
  %240 = vmatprep.mubr.f32.mxu0 0.0
  %241 = vmatmul.mubr.f32.gmra.mrb[0].mxu0 %v161
  %v242 = vpop.f32.mrb[0].mxu0
  %v243 = vadd.f32 0.0, %v242
  %v244 = vpop.f32.mrb[0].mxu0
  %245 = vmatprep.mubr.f32.mxu0 0.0
  %246 = vmatmul.mubr.f32.gmra.mrb[0].mxu0 %v164
  %v247 = vpop.f32.mrb[0].mxu0
  %v248 = vadd.f32 0.0, %v247
  %v249 = vpop.f32.mrb[0].mxu0
  %250 = vdwg.mxu0
  %v252 = vsel %vm153, %v132, 0
  %v255 = vsel %vm153, %v133, 0
  %v258 = vsel %vm153, %v134, 0
  %v261 = vsel %vm153, %v135, 0
  %263 = vmatprep.subr.mxu0 0.0
  %264 = vmatpush1.msra.mxu0 %v42
  %265 = vmatprep.subr.mxu0 0.0
  %266 = vmatpush1.msra.mxu0 %v43
  %267 = vmatprep.subr.mxu0 0.0
  %268 = vmatpush1.msra.mxu0 %v44
  %269 = vmatprep.subr.mxu0 0.0
  %270 = vmatpush1.msra.mxu0 %v45
  %271 = vmatprep.subr.mxu0 0.0
  %272 = vmatpush1.msra.mxu0 %v46
  %273 = vmatprep.subr.mxu0 0.0
  %274 = vmatpush1.msra.mxu0 %v47
  %275 = vmatprep.subr.mxu0 0.0
  %276 = vmatpush1.msra.mxu0 %v48
  %277 = vmatprep.subr.mxu0 0.0
  %278 = vmatpush1.msra.mxu0 %v49
  %279 = vmatprep.subr.mxu0 0.0
  %280 = vmatpush1.msra.mxu0 0.0
  %281 = vmatprep.subr.mxu0 0.0
  %282 = vmatpush1.msra.mxu0 0.0
  %283 = vmatprep.subr.mxu0 0.0
  %284 = vmatpush1.msra.mxu0 0.0
  %285 = vmatprep.subr.mxu0 0.0
  %286 = vmatpush1.msra.mxu0 0.0
  %287 = vmatprep.subr.mxu0 0.0
  %288 = vmatpush1.msra.mxu0 0.0
  %289 = vmatprep.subr.mxu0 0.0
  %290 = vmatpush1.msra.mxu0 0.0
  %291 = vmatprep.subr.mxu0 0.0
  %292 = vmatpush1.msra.mxu0 0.0
  %293 = vmatprep.subr.mxu0 0.0
  %294 = vmatpush1.msra.mxu0 0.0
  %295 = vmatprep.subr.mxu0 0.0
  %296 = vmatpush1.msra.mxu0 0.0
  %297 = vmatprep.subr.mxu0 0.0
  %298 = vmatpush1.msra.mxu0 0.0
  %299 = vmatprep.subr.mxu0 0.0
  %300 = vmatpush1.msra.mxu0 0.0
  %301 = vmatprep.subr.mxu0 0.0
  %302 = vmatpush1.msra.mxu0 0.0
  %303 = vmatprep.subr.mxu0 0.0
  %304 = vmatpush1.msra.mxu0 0.0
  %305 = vmatprep.subr.mxu0 0.0
  %306 = vmatpush1.msra.mxu0 0.0
  %307 = vmatprep.subr.mxu0 0.0
  %308 = vmatpush1.msra.mxu0 0.0
  %309 = vmatprep.subr.mxu0 0.0
  %310 = vmatpush1.msra.mxu0 0.0
  %311 = vmatprep.subr.mxu0 0.0
  %312 = vmatpush1.msra.mxu0 0.0
  %313 = vmatprep.subr.mxu0 0.0
  %314 = vmatpush1.msra.mxu0 0.0
  %315 = vmatprep.subr.mxu0 0.0
  %316 = vmatpush1.msra.mxu0 0.0
  %317 = vmatprep.subr.mxu0 0.0
  %318 = vmatpush1.msra.mxu0 0.0
  %319 = vmatprep.subr.mxu0 0.0
  %320 = vmatpush1.msra.mxu0 0.0
  %321 = vmatprep.subr.mxu0 0.0
  %322 = vmatpush1.msra.mxu0 0.0
  %323 = vmatprep.subr.mxu0 0.0
  %324 = vmatpush1.msra.mxu0 0.0
  %325 = vmatprep.subr.mxu0 0.0
  %326 = vmatpush1.msra.mxu0 0.0
  %327 = vmatprep.mubr.f32.mxu0 0.0
  %328 = vmatmul.mubr.f32.gmra.mrb[0].mxu0 %v252
  %v329 = vpop.f32.mrb[0].mxu0
  %v330 = vadd.f32 %v233, %v329
  %v331 = vpop.f32.mrb[0].mxu0
  %332 = vmatprep.mubr.f32.mxu0 0.0
  %333 = vmatmul.mubr.f32.gmra.mrb[0].mxu0 %v255
  %v334 = vpop.f32.mrb[0].mxu0
  %v335 = vadd.f32 %v238, %v334
  %v336 = vpop.f32.mrb[0].mxu0
  %337 = vmatprep.mubr.f32.mxu0 0.0
  %338 = vmatmul.mubr.f32.gmra.mrb[0].mxu0 %v258
  %v339 = vpop.f32.mrb[0].mxu0
  %v340 = vadd.f32 %v243, %v339
  %v341 = vpop.f32.mrb[0].mxu0
  %342 = vmatprep.mubr.f32.mxu0 0.0
  %343 = vmatmul.mubr.f32.gmra.mrb[0].mxu0 %v261
  %v344 = vpop.f32.mrb[0].mxu0
  %v345 = vadd.f32 %v248, %v344
  %v346 = vpop.f32.mrb[0].mxu0
  %347 = vdwg.mxu0
  %v349 = vsel %vm153, %v149, 0
  %v352 = vsel %vm153, %v150, 0
  %v355 = vsel %vm153, %v151, 0
  %v358 = vsel %vm153, %v152, 0
  %360 = vmatprep.subr.mxu0 0.0
  %361 = vmatpush1.msra.mxu0 %v58
  %362 = vmatprep.subr.mxu0 0.0
  %363 = vmatpush1.msra.mxu0 %v59
  %364 = vmatprep.subr.mxu0 0.0
  %365 = vmatpush1.msra.mxu0 %v60
  %366 = vmatprep.subr.mxu0 0.0
  %367 = vmatpush1.msra.mxu0 %v61
  %368 = vmatprep.subr.mxu0 0.0
  %369 = vmatpush1.msra.mxu0 %v62
  %370 = vmatprep.subr.mxu0 0.0
  %371 = vmatpush1.msra.mxu0 %v63
  %372 = vmatprep.subr.mxu0 0.0
  %373 = vmatpush1.msra.mxu0 %v64
  %374 = vmatprep.subr.mxu0 0.0
  %375 = vmatpush1.msra.mxu0 %v65
  %376 = vmatprep.subr.mxu0 0.0
  %377 = vmatpush1.msra.mxu0 0.0
  %378 = vmatprep.subr.mxu0 0.0
  %379 = vmatpush1.msra.mxu0 0.0
  %380 = vmatprep.subr.mxu0 0.0
  %381 = vmatpush1.msra.mxu0 0.0
  %382 = vmatprep.subr.mxu0 0.0
  %383 = vmatpush1.msra.mxu0 0.0
  %384 = vmatprep.subr.mxu0 0.0
  %385 = vmatpush1.msra.mxu0 0.0
  %386 = vmatprep.subr.mxu0 0.0
  %387 = vmatpush1.msra.mxu0 0.0
  %388 = vmatprep.subr.mxu0 0.0
  %389 = vmatpush1.msra.mxu0 0.0
  %390 = vmatprep.subr.mxu0 0.0
  %391 = vmatpush1.msra.mxu0 0.0
  %392 = vmatprep.subr.mxu0 0.0
  %393 = vmatpush1.msra.mxu0 0.0
  %394 = vmatprep.subr.mxu0 0.0
  %395 = vmatpush1.msra.mxu0 0.0
  %396 = vmatprep.subr.mxu0 0.0
  %397 = vmatpush1.msra.mxu0 0.0
  %398 = vmatprep.subr.mxu0 0.0
  %399 = vmatpush1.msra.mxu0 0.0
  %400 = vmatprep.subr.mxu0 0.0
  %401 = vmatpush1.msra.mxu0 0.0
  %402 = vmatprep.subr.mxu0 0.0
  %403 = vmatpush1.msra.mxu0 0.0
  %404 = vmatprep.subr.mxu0 0.0
  %405 = vmatpush1.msra.mxu0 0.0
  %406 = vmatprep.subr.mxu0 0.0
  %407 = vmatpush1.msra.mxu0 0.0
  %408 = vmatprep.subr.mxu0 0.0
  %409 = vmatpush1.msra.mxu0 0.0
  %410 = vmatprep.subr.mxu0 0.0
  %411 = vmatpush1.msra.mxu0 0.0
  %412 = vmatprep.subr.mxu0 0.0
  %413 = vmatpush1.msra.mxu0 0.0
  %414 = vmatprep.subr.mxu0 0.0
  %415 = vmatpush1.msra.mxu0 0.0
  %416 = vmatprep.subr.mxu0 0.0
  %417 = vmatpush1.msra.mxu0 0.0
  %418 = vmatprep.subr.mxu0 0.0
  %419 = vmatpush1.msra.mxu0 0.0
  %420 = vmatprep.subr.mxu0 0.0
  %421 = vmatpush1.msra.mxu0 0.0
  %422 = vmatprep.subr.mxu0 0.0
  %423 = vmatpush1.msra.mxu0 0.0
  %424 = vmatprep.mubr.f32.mxu0 0.0
  %425 = vmatmul.mubr.f32.gmra.mrb[0].mxu0 %v349
  %v426 = vpop.f32.mrb[0].mxu0
  %v427 = vadd.f32 0.0, %v426
  %v428 = vpop.f32.mrb[0].mxu0
  %429 = vmatprep.mubr.f32.mxu0 0.0
  %430 = vmatmul.mubr.f32.gmra.mrb[0].mxu0 %v352
  %v431 = vpop.f32.mrb[0].mxu0
  %v432 = vadd.f32 0.0, %v431
  %v433 = vpop.f32.mrb[0].mxu0
  %434 = vmatprep.mubr.f32.mxu0 0.0
  %435 = vmatmul.mubr.f32.gmra.mrb[0].mxu0 %v355
  %v436 = vpop.f32.mrb[0].mxu0
  %v437 = vadd.f32 0.0, %v436
  %v438 = vpop.f32.mrb[0].mxu0
  %439 = vmatprep.mubr.f32.mxu0 0.0
  %440 = vmatmul.mubr.f32.gmra.mrb[0].mxu0 %v358
  %v441 = vpop.f32.mrb[0].mxu0
  %v442 = vadd.f32 0.0, %v441
  %v443 = vpop.f32.mrb[0].mxu0
  %444 = vdwg.mxu0
  %v445 = vadd.f32 %v330, %v427
  %v446 = vadd.f32 %v335, %v432
  %v447 = vadd.f32 %v340, %v437
  %v448 = vadd.f32 %v345, %v442
  %v449 = vadd.f32 %v445, %v446
  %v450 = vadd.f32 %v449, %v447
  %v451 = vadd.f32 %v450, %v448
  %v452 = vrot.slane %v451, 4
  %v453 = vadd.f32 %v451, %v452
  %v454 = vrot.slane %v453, 2
  %v455 = vadd.f32 %v453, %v454
  %v456 = vrot.slane %v455, 1
  %v457 = vadd.f32 %v455, %v456
  %v458 = vmul.f32 %v445, %v445
  %v459 = vmul.f32 %v446, %v446
  %v460 = vmul.f32 %v447, %v447
  %v461 = vmul.f32 %v448, %v448
  %v462 = vadd.f32 %v458, %v459
  %v463 = vadd.f32 %v462, %v460
  %v464 = vadd.f32 %v463, %v461
  %v465 = vrot.slane %v464, 4
  %v466 = vadd.f32 %v464, %v465
  %v467 = vrot.slane %v466, 2
  %v468 = vadd.f32 %v466, %v467
  %v469 = vrot.slane %v468, 1
  %v470 = vadd.f32 %v468, %v469
  %vm471 = vcmask 1040384
  %v472 = vsel %vm471, %v457, %v470
  %473 = vmatprep.subr.mxu0 0.0
  %474 = vmatpush1.msra.mxu0 %v24
  %475 = vmatprep.subr.mxu0 0.0
  %476 = vmatpush1.msra.mxu0 %v25
  %477 = vmatprep.subr.mxu0 0.0
  %478 = vmatpush1.msra.mxu0 %v26
  %479 = vmatprep.subr.mxu0 0.0
  %480 = vmatpush1.msra.mxu0 %v27
  %481 = vmatprep.subr.mxu0 0.0
  %482 = vmatpush1.msra.mxu0 %v28
  %483 = vmatprep.subr.mxu0 0.0
  %484 = vmatpush1.msra.mxu0 %v29
  %485 = vmatprep.subr.mxu0 0.0
  %486 = vmatpush1.msra.mxu0 %v30
  %487 = vmatprep.subr.mxu0 0.0
  %488 = vmatpush1.msra.mxu0 %v31
  %489 = vmatprep.subr.mxu0 0.0
  %490 = vmatpush1.msra.mxu0 %v32
  %491 = vmatprep.subr.mxu0 0.0
  %492 = vmatpush1.msra.mxu0 %v33
  %493 = vmatprep.subr.mxu0 0.0
  %494 = vmatpush1.msra.mxu0 %v34
  %495 = vmatprep.subr.mxu0 0.0
  %496 = vmatpush1.msra.mxu0 %v35
  %497 = vmatprep.subr.mxu0 0.0
  %498 = vmatpush1.msra.mxu0 %v36
  %499 = vmatprep.subr.mxu0 0.0
  %500 = vmatpush1.msra.mxu0 %v37
  %501 = vmatprep.subr.mxu0 0.0
  %502 = vmatpush1.msra.mxu0 %v38
  %503 = vmatprep.subr.mxu0 0.0
  %504 = vmatpush1.msra.mxu0 %v39
  %505 = vmatprep.subr.mxu0 0.0
  %506 = vmatpush1.msra.mxu0 0.0
  %507 = vmatprep.subr.mxu0 0.0
  %508 = vmatpush1.msra.mxu0 0.0
  %509 = vmatprep.subr.mxu0 0.0
  %510 = vmatpush1.msra.mxu0 0.0
  %511 = vmatprep.subr.mxu0 0.0
  %512 = vmatpush1.msra.mxu0 0.0
  %513 = vmatprep.subr.mxu0 0.0
  %514 = vmatpush1.msra.mxu0 0.0
  %515 = vmatprep.subr.mxu0 0.0
  %516 = vmatpush1.msra.mxu0 0.0
  %517 = vmatprep.subr.mxu0 0.0
  %518 = vmatpush1.msra.mxu0 0.0
  %519 = vmatprep.subr.mxu0 0.0
  %520 = vmatpush1.msra.mxu0 0.0
  %521 = vmatprep.subr.mxu0 0.0
  %522 = vmatpush1.msra.mxu0 0.0
  %523 = vmatprep.subr.mxu0 0.0
  %524 = vmatpush1.msra.mxu0 0.0
  %525 = vmatprep.subr.mxu0 0.0
  %526 = vmatpush1.msra.mxu0 0.0
  %527 = vmatprep.subr.mxu0 0.0
  %528 = vmatpush1.msra.mxu0 0.0
  %529 = vmatprep.subr.mxu0 0.0
  %530 = vmatpush1.msra.mxu0 0.0
  %531 = vmatprep.subr.mxu0 0.0
  %532 = vmatpush1.msra.mxu0 0.0
  %533 = vmatprep.subr.mxu0 0.0
  %534 = vmatpush1.msra.mxu0 0.0
  %535 = vmatprep.subr.mxu0 0.0
  %536 = vmatpush1.msra.mxu0 0.0
  %537 = vmatprep.mubr.f32.mxu0 0.0
  %538 = vmatmul.mubr.f32.gmra.mrb[0].mxu0 %v472
  %v539 = vpop.f32.mrb[0].mxu0
  %v540 = vadd.f32 0.0, %v539
  %v541 = vpop.f32.mrb[0].mxu0
  %542 = vdwg.mxu0
  %v543 = vmul.f32 %v540, 0.001953125
  %v544 = vmul.f32 %v543, %v543
  %v546 = vrot.slane %v544, 7
  %v548 = vsub.f32 %v543, %v546
  %v549 = vadd.f32 %v548, 1e-05
  %v550 = vrsqrt.pop %v549
  %v552 = vrot.slane %v550, 1
  %v554 = vmul.f32 %v41, %v552
  %v555 = vmul.f32 %v543, %v554
  %v557 = vrot.slane %v555, 7
  %v559 = vsub.f32 %v41, %v557
  %v560 = vsel %vm471, %v554, %v559
  %vm561 = vcmask 64512
  %v563 = vsel %vm561, %v560, 0
  %565 = vmatprep.subr.mxu0 0.0
  %566 = vmatpush1.msra.mxu0 %v40
  %567 = vmatprep.subr.mxu0 0.0
  %568 = vmatpush1.msra.mxu0 0.0
  %569 = vmatprep.subr.mxu0 0.0
  %570 = vmatpush1.msra.mxu0 0.0
  %571 = vmatprep.subr.mxu0 0.0
  %572 = vmatpush1.msra.mxu0 0.0
  %573 = vmatprep.subr.mxu0 0.0
  %574 = vmatpush1.msra.mxu0 0.0
  %575 = vmatprep.subr.mxu0 0.0
  %576 = vmatpush1.msra.mxu0 0.0
  %577 = vmatprep.subr.mxu0 0.0
  %578 = vmatpush1.msra.mxu0 0.0
  %579 = vmatprep.subr.mxu0 0.0
  %580 = vmatpush1.msra.mxu0 0.0
  %581 = vmatprep.subr.mxu0 0.0
  %582 = vmatpush1.msra.mxu0 0.0
  %583 = vmatprep.subr.mxu0 0.0
  %584 = vmatpush1.msra.mxu0 0.0
  %585 = vmatprep.subr.mxu0 0.0
  %586 = vmatpush1.msra.mxu0 0.0
  %587 = vmatprep.subr.mxu0 0.0
  %588 = vmatpush1.msra.mxu0 0.0
  %589 = vmatprep.subr.mxu0 0.0
  %590 = vmatpush1.msra.mxu0 0.0
  %591 = vmatprep.subr.mxu0 0.0
  %592 = vmatpush1.msra.mxu0 0.0
  %593 = vmatprep.subr.mxu0 0.0
  %594 = vmatpush1.msra.mxu0 0.0
  %595 = vmatprep.subr.mxu0 0.0
  %596 = vmatpush1.msra.mxu0 0.0
  %597 = vmatprep.subr.mxu0 0.0
  %598 = vmatpush1.msra.mxu0 0.0
  %599 = vmatprep.subr.mxu0 0.0
  %600 = vmatpush1.msra.mxu0 0.0
  %601 = vmatprep.subr.mxu0 0.0
  %602 = vmatpush1.msra.mxu0 0.0
  %603 = vmatprep.subr.mxu0 0.0
  %604 = vmatpush1.msra.mxu0 0.0
  %605 = vmatprep.subr.mxu0 0.0
  %606 = vmatpush1.msra.mxu0 0.0
  %607 = vmatprep.subr.mxu0 0.0
  %608 = vmatpush1.msra.mxu0 0.0
  %609 = vmatprep.subr.mxu0 0.0
  %610 = vmatpush1.msra.mxu0 0.0
  %611 = vmatprep.subr.mxu0 0.0
  %612 = vmatpush1.msra.mxu0 0.0
  %613 = vmatprep.subr.mxu0 0.0
  %614 = vmatpush1.msra.mxu0 0.0
  %615 = vmatprep.subr.mxu0 0.0
  %616 = vmatpush1.msra.mxu0 0.0
  %617 = vmatprep.subr.mxu0 0.0
  %618 = vmatpush1.msra.mxu0 0.0
  %619 = vmatprep.subr.mxu0 0.0
  %620 = vmatpush1.msra.mxu0 0.0
  %621 = vmatprep.subr.mxu0 0.0
  %622 = vmatpush1.msra.mxu0 0.0
  %623 = vmatprep.subr.mxu0 0.0
  %624 = vmatpush1.msra.mxu0 0.0
  %625 = vmatprep.subr.mxu0 0.0
  %626 = vmatpush1.msra.mxu0 0.0
  %627 = vmatprep.subr.mxu0 0.0
  %628 = vmatpush1.msra.mxu0 0.0
  %629 = vmatprep.mubr.f32.mxu0 0.0
  %630 = vmatmul.mubr.f32.gmra.mrb[0].mxu0 %v563
  %v631 = vpop.f32.mrb[0].mxu0
  %v632 = vadd.f32 0.0, %v631
  %v633 = vpop.f32.mrb[0].mxu0
  %634 = vdwg.mxu0
  %v635 = vlaneseq
  %v636 = vshrl.u32 %v635, 7
  %v637 = vsub.s32 0, %v636
  %v638 = vrot.slane %v632, %v637
  %v639 = vmul.f32 %v445, %v638
  %v640 = vmul.f32 %v446, %v638
  %v641 = vmul.f32 %v447, %v638
  %v642 = vmul.f32 %v448, %v638
  %v643 = vlaneseq
  %v644 = vshrl.u32 %v643, 7
  %v645 = vsub.s32 1, %v644
  %v646 = vrot.slane %v632, %v645
  %v647 = vadd.f32 %v639, %v646
  %v648 = vadd.f32 %v640, %v646
  %v649 = vadd.f32 %v641, %v646
  %v650 = vadd.f32 %v642, %v646
  %v651 = vmax.f32 %v647, 0.0
  %v652 = vmax.f32 %v648, 0.0
  %v653 = vmax.f32 %v649, 0.0
  %v654 = vmax.f32 %v650, 0.0
  %v655 = vld [vmem:[%s1 + $0xc0] sm:$0xff]
  %v656 = vld [vmem:[%s1 + $0xc8] sm:$0xff]
  %v657 = vld [vmem:[%s1 + $0xd0] sm:$0xff]
  %v658 = vld [vmem:[%s1 + $0xd8] sm:$0xff]
  %v659 = vld [vmem:[%s1 + $0xe0] sm:$0xff]
  %v660 = vld [vmem:[%s1 + $0xe8] sm:$0xff]
  %v661 = vld [vmem:[%s1 + $0xf0] sm:$0xff]
  %v662 = vld [vmem:[%s1 + $0xf8] sm:$0xff]
  %v663 = vld [vmem:[%s1 + $0x100] sm:$0xff]
  %v664 = vld [vmem:[%s1 + $0x108] sm:$0xff]
  %v665 = vld [vmem:[%s1 + $0x110] sm:$0xff]
  %v666 = vld [vmem:[%s1 + $0x118] sm:$0xff]
  %v667 = vld [vmem:[%s1 + $0x120] sm:$0xff]
  %v668 = vld [vmem:[%s1 + $0x128] sm:$0xff]
  %v669 = vld [vmem:[%s1 + $0x130] sm:$0xff]
  %v670 = vld [vmem:[%s1 + $0x138] sm:$0xff]
  %v671 = vld [vmem:[%s1 + $0x140] sm:$0xff]
  %v672 = vld [vmem:[%s1 + $0x148] sm:$0xff]
  %v673 = vld [vmem:[%s1 + $0x150] sm:$0xff]
  %v674 = vld [vmem:[%s1 + $0x158] sm:$0xff]
  %v675 = vld [vmem:[%s1 + $0x160] sm:$0xff]
  %v676 = vld [vmem:[%s1 + $0x168] sm:$0xff]
  %v677 = vld [vmem:[%s1 + $0x170] sm:$0xff]
  %v678 = vld [vmem:[%s1 + $0x178] sm:$0xff]
  %v679 = vld [vmem:[%s1 + $0x180] sm:$0xff]
  %v680 = vld [vmem:[%s1 + $0x188] sm:$0xff]
  %v681 = vld [vmem:[%s1 + $0x190] sm:$0xff]
  %v682 = vld [vmem:[%s1 + $0x198] sm:$0xff]
  %v683 = vld [vmem:[%s1 + $0x1a0] sm:$0xff]
  %v684 = vld [vmem:[%s1 + $0x1a8] sm:$0xff]
  %v685 = vld [vmem:[%s1 + $0x1b0] sm:$0xff]
  %v686 = vld [vmem:[%s1 + $0x1b8] sm:$0xff]
  %v687 = vld [vmem:[%s1 + $0x1c0] sm:$0xff]
  %v688 = vld [vmem:[%s1 + $0x1c8] sm:$0xff]
  %v689 = vld [vmem:[%s1 + $0x1d0] sm:$0xff]
  %v690 = vld [vmem:[%s1 + $0x1d8] sm:$0xff]
  %v691 = vld [vmem:[%s1 + $0x1e0] sm:$0xff]
  %v692 = vld [vmem:[%s1 + $0x1e8] sm:$0xff]
  %v693 = vld [vmem:[%s1 + $0x1f0] sm:$0xff]
  %v694 = vld [vmem:[%s1 + $0x1f8] sm:$0xff]
  %v695 = vld [vmem:[%s1 + $0x200] sm:$0xff]
  %v696 = vld [vmem:[%s1 + $0x208] sm:$0xff]
  %v697 = vld [vmem:[%s1 + $0x210] sm:$0xff]
  %v698 = vld [vmem:[%s1 + $0x218] sm:$0xff]
  %v699 = vld [vmem:[%s1 + $0x220] sm:$0xff]
  %v700 = vld [vmem:[%s1 + $0x228] sm:$0xff]
  %v701 = vld [vmem:[%s1 + $0x230] sm:$0xff]
  %v702 = vld [vmem:[%s1 + $0x238] sm:$0xff]
  %v703 = vrot.slane %v651, 7
  %v704 = vrot.slane %v652, 7
  %v705 = vrot.slane %v653, 7
  %v706 = vrot.slane %v654, 7
  %v707 = vsel %vm127, %v705, %v706
  %v708 = vsel %vm127, %v704, %v705
  %v709 = vsel %vm127, %v703, %v704
  %v710 = vsel %vm127, %v706, %v703
  %v711 = vsel %vm119, %v710, 0.0
  %v712 = vsel %vm120, %v709, 0.0
  %v713 = vsel %vm121, %v708, 0.0
  %v714 = vsel %vm122, %v707, 0.0
  %v715 = vrot.slane %v651, 1
  %v716 = vrot.slane %v652, 1
  %v717 = vrot.slane %v653, 1
  %v718 = vrot.slane %v654, 1
  %v719 = vsel %vm144, %v717, %v718
  %v720 = vsel %vm144, %v716, %v717
  %v721 = vsel %vm144, %v715, %v716
  %v722 = vsel %vm144, %v718, %v715
  %v723 = vsel %vm136, %v721, 0.0
  %v724 = vsel %vm137, %v720, 0.0
  %v725 = vsel %vm138, %v719, 0.0
  %v726 = vsel %vm139, %v722, 0.0
  %727 = vmatprep.subr.mxu0 0.0
  %728 = vmatpush1.msra.mxu0 %v671
  %729 = vmatprep.subr.mxu0 0.0
  %730 = vmatpush1.msra.mxu0 %v672
  %731 = vmatprep.subr.mxu0 0.0
  %732 = vmatpush1.msra.mxu0 %v673
  %733 = vmatprep.subr.mxu0 0.0
  %734 = vmatpush1.msra.mxu0 %v674
  %735 = vmatprep.subr.mxu0 0.0
  %736 = vmatpush1.msra.mxu0 %v675
  %737 = vmatprep.subr.mxu0 0.0
  %738 = vmatpush1.msra.mxu0 %v676
  %739 = vmatprep.subr.mxu0 0.0
  %740 = vmatpush1.msra.mxu0 %v677
  %741 = vmatprep.subr.mxu0 0.0
  %742 = vmatpush1.msra.mxu0 %v678
  %743 = vmatprep.subr.mxu0 0.0
  %744 = vmatpush1.msra.mxu0 %v679
  %745 = vmatprep.subr.mxu0 0.0
  %746 = vmatpush1.msra.mxu0 %v680
  %747 = vmatprep.subr.mxu0 0.0
  %748 = vmatpush1.msra.mxu0 %v681
  %749 = vmatprep.subr.mxu0 0.0
  %750 = vmatpush1.msra.mxu0 %v682
  %751 = vmatprep.subr.mxu0 0.0
  %752 = vmatpush1.msra.mxu0 %v683
  %753 = vmatprep.subr.mxu0 0.0
  %754 = vmatpush1.msra.mxu0 %v684
  %755 = vmatprep.subr.mxu0 0.0
  %756 = vmatpush1.msra.mxu0 %v685
  %757 = vmatprep.subr.mxu0 0.0
  %758 = vmatpush1.msra.mxu0 %v686
  %759 = vmatprep.subr.mxu0 0.0
  %760 = vmatpush1.msra.mxu0 0.0
  %761 = vmatprep.subr.mxu0 0.0
  %762 = vmatpush1.msra.mxu0 0.0
  %763 = vmatprep.subr.mxu0 0.0
  %764 = vmatpush1.msra.mxu0 0.0
  %765 = vmatprep.subr.mxu0 0.0
  %766 = vmatpush1.msra.mxu0 0.0
  %767 = vmatprep.subr.mxu0 0.0
  %768 = vmatpush1.msra.mxu0 0.0
  %769 = vmatprep.subr.mxu0 0.0
  %770 = vmatpush1.msra.mxu0 0.0
  %771 = vmatprep.subr.mxu0 0.0
  %772 = vmatpush1.msra.mxu0 0.0
  %773 = vmatprep.subr.mxu0 0.0
  %774 = vmatpush1.msra.mxu0 0.0
  %775 = vmatprep.subr.mxu0 0.0
  %776 = vmatpush1.msra.mxu0 0.0
  %777 = vmatprep.subr.mxu0 0.0
  %778 = vmatpush1.msra.mxu0 0.0
  %779 = vmatprep.subr.mxu0 0.0
  %780 = vmatpush1.msra.mxu0 0.0
  %781 = vmatprep.subr.mxu0 0.0
  %782 = vmatpush1.msra.mxu0 0.0
  %783 = vmatprep.subr.mxu0 0.0
  %784 = vmatpush1.msra.mxu0 0.0
  %785 = vmatprep.subr.mxu0 0.0
  %786 = vmatpush1.msra.mxu0 0.0
  %787 = vmatprep.subr.mxu0 0.0
  %788 = vmatpush1.msra.mxu0 0.0
  %789 = vmatprep.subr.mxu0 0.0
  %790 = vmatpush1.msra.mxu0 0.0
  %791 = vmatprep.mubr.f32.mxu0 0.0
  %792 = vmatmul.mubr.f32.gmra.mrb[0].mxu0 %v651
  %v793 = vpop.f32.mrb[0].mxu0
  %v794 = vadd.f32 0.0, %v793
  %v795 = vpop.f32.mrb[0].mxu0
  %796 = vmatprep.mubr.f32.mxu0 0.0
  %797 = vmatmul.mubr.f32.gmra.mrb[0].mxu0 %v652
  %v798 = vpop.f32.mrb[0].mxu0
  %v799 = vadd.f32 0.0, %v798
  %v800 = vpop.f32.mrb[0].mxu0
  %801 = vmatprep.mubr.f32.mxu0 0.0
  %802 = vmatmul.mubr.f32.gmra.mrb[0].mxu0 %v653
  %v803 = vpop.f32.mrb[0].mxu0
  %v804 = vadd.f32 0.0, %v803
  %v805 = vpop.f32.mrb[0].mxu0
  %806 = vmatprep.mubr.f32.mxu0 0.0
  %807 = vmatmul.mubr.f32.gmra.mrb[0].mxu0 %v654
  %v808 = vpop.f32.mrb[0].mxu0
  %v809 = vadd.f32 0.0, %v808
  %v810 = vpop.f32.mrb[0].mxu0
  %811 = vdwg.mxu0
  %812 = vmatprep.subr.mxu0 0.0
  %813 = vmatpush1.msra.mxu0 %v655
  %814 = vmatprep.subr.mxu0 0.0
  %815 = vmatpush1.msra.mxu0 %v656
  %816 = vmatprep.subr.mxu0 0.0
  %817 = vmatpush1.msra.mxu0 %v657
  %818 = vmatprep.subr.mxu0 0.0
  %819 = vmatpush1.msra.mxu0 %v658
  %820 = vmatprep.subr.mxu0 0.0
  %821 = vmatpush1.msra.mxu0 %v659
  %822 = vmatprep.subr.mxu0 0.0
  %823 = vmatpush1.msra.mxu0 %v660
  %824 = vmatprep.subr.mxu0 0.0
  %825 = vmatpush1.msra.mxu0 %v661
  %826 = vmatprep.subr.mxu0 0.0
  %827 = vmatpush1.msra.mxu0 %v662
  %828 = vmatprep.subr.mxu0 0.0
  %829 = vmatpush1.msra.mxu0 %v663
  %830 = vmatprep.subr.mxu0 0.0
  %831 = vmatpush1.msra.mxu0 %v664
  %832 = vmatprep.subr.mxu0 0.0
  %833 = vmatpush1.msra.mxu0 %v665
  %834 = vmatprep.subr.mxu0 0.0
  %835 = vmatpush1.msra.mxu0 %v666
  %836 = vmatprep.subr.mxu0 0.0
  %837 = vmatpush1.msra.mxu0 %v667
  %838 = vmatprep.subr.mxu0 0.0
  %839 = vmatpush1.msra.mxu0 %v668
  %840 = vmatprep.subr.mxu0 0.0
  %841 = vmatpush1.msra.mxu0 %v669
  %842 = vmatprep.subr.mxu0 0.0
  %843 = vmatpush1.msra.mxu0 %v670
  %844 = vmatprep.subr.mxu0 0.0
  %845 = vmatpush1.msra.mxu0 0.0
  %846 = vmatprep.subr.mxu0 0.0
  %847 = vmatpush1.msra.mxu0 0.0
  %848 = vmatprep.subr.mxu0 0.0
  %849 = vmatpush1.msra.mxu0 0.0
  %850 = vmatprep.subr.mxu0 0.0
  %851 = vmatpush1.msra.mxu0 0.0
  %852 = vmatprep.subr.mxu0 0.0
  %853 = vmatpush1.msra.mxu0 0.0
  %854 = vmatprep.subr.mxu0 0.0
  %855 = vmatpush1.msra.mxu0 0.0
  %856 = vmatprep.subr.mxu0 0.0
  %857 = vmatpush1.msra.mxu0 0.0
  %858 = vmatprep.subr.mxu0 0.0
  %859 = vmatpush1.msra.mxu0 0.0
  %860 = vmatprep.subr.mxu0 0.0
  %861 = vmatpush1.msra.mxu0 0.0
  %862 = vmatprep.subr.mxu0 0.0
  %863 = vmatpush1.msra.mxu0 0.0
  %864 = vmatprep.subr.mxu0 0.0
  %865 = vmatpush1.msra.mxu0 0.0
  %866 = vmatprep.subr.mxu0 0.0
  %867 = vmatpush1.msra.mxu0 0.0
  %868 = vmatprep.subr.mxu0 0.0
  %869 = vmatpush1.msra.mxu0 0.0
  %870 = vmatprep.subr.mxu0 0.0
  %871 = vmatpush1.msra.mxu0 0.0
  %872 = vmatprep.subr.mxu0 0.0
  %873 = vmatpush1.msra.mxu0 0.0
  %874 = vmatprep.subr.mxu0 0.0
  %875 = vmatpush1.msra.mxu0 0.0
  %876 = vmatprep.mubr.f32.mxu0 0.0
  %877 = vmatmul.mubr.f32.gmra.mrb[0].mxu0 %v711
  %v878 = vpop.f32.mrb[0].mxu0
  %v879 = vadd.f32 %v794, %v878
  %v880 = vpop.f32.mrb[0].mxu0
  %881 = vmatprep.mubr.f32.mxu0 0.0
  %882 = vmatmul.mubr.f32.gmra.mrb[0].mxu0 %v712
  %v883 = vpop.f32.mrb[0].mxu0
  %v884 = vadd.f32 %v799, %v883
  %v885 = vpop.f32.mrb[0].mxu0
  %886 = vmatprep.mubr.f32.mxu0 0.0
  %887 = vmatmul.mubr.f32.gmra.mrb[0].mxu0 %v713
  %v888 = vpop.f32.mrb[0].mxu0
  %v889 = vadd.f32 %v804, %v888
  %v890 = vpop.f32.mrb[0].mxu0
  %891 = vmatprep.mubr.f32.mxu0 0.0
  %892 = vmatmul.mubr.f32.gmra.mrb[0].mxu0 %v714
  %v893 = vpop.f32.mrb[0].mxu0
  %v894 = vadd.f32 %v809, %v893
  %v895 = vpop.f32.mrb[0].mxu0
  %896 = vdwg.mxu0
  %897 = vmatprep.subr.mxu0 0.0
  %898 = vmatpush1.msra.mxu0 %v687
  %899 = vmatprep.subr.mxu0 0.0
  %900 = vmatpush1.msra.mxu0 %v688
  %901 = vmatprep.subr.mxu0 0.0
  %902 = vmatpush1.msra.mxu0 %v689
  %903 = vmatprep.subr.mxu0 0.0
  %904 = vmatpush1.msra.mxu0 %v690
  %905 = vmatprep.subr.mxu0 0.0
  %906 = vmatpush1.msra.mxu0 %v691
  %907 = vmatprep.subr.mxu0 0.0
  %908 = vmatpush1.msra.mxu0 %v692
  %909 = vmatprep.subr.mxu0 0.0
  %910 = vmatpush1.msra.mxu0 %v693
  %911 = vmatprep.subr.mxu0 0.0
  %912 = vmatpush1.msra.mxu0 %v694
  %913 = vmatprep.subr.mxu0 0.0
  %914 = vmatpush1.msra.mxu0 %v695
  %915 = vmatprep.subr.mxu0 0.0
  %916 = vmatpush1.msra.mxu0 %v696
  %917 = vmatprep.subr.mxu0 0.0
  %918 = vmatpush1.msra.mxu0 %v697
  %919 = vmatprep.subr.mxu0 0.0
  %920 = vmatpush1.msra.mxu0 %v698
  %921 = vmatprep.subr.mxu0 0.0
  %922 = vmatpush1.msra.mxu0 %v699
  %923 = vmatprep.subr.mxu0 0.0
  %924 = vmatpush1.msra.mxu0 %v700
  %925 = vmatprep.subr.mxu0 0.0
  %926 = vmatpush1.msra.mxu0 %v701
  %927 = vmatprep.subr.mxu0 0.0
  %928 = vmatpush1.msra.mxu0 %v702
  %929 = vmatprep.subr.mxu0 0.0
  %930 = vmatpush1.msra.mxu0 0.0
  %931 = vmatprep.subr.mxu0 0.0
  %932 = vmatpush1.msra.mxu0 0.0
  %933 = vmatprep.subr.mxu0 0.0
  %934 = vmatpush1.msra.mxu0 0.0
  %935 = vmatprep.subr.mxu0 0.0
  %936 = vmatpush1.msra.mxu0 0.0
  %937 = vmatprep.subr.mxu0 0.0
  %938 = vmatpush1.msra.mxu0 0.0
  %939 = vmatprep.subr.mxu0 0.0
  %940 = vmatpush1.msra.mxu0 0.0
  %941 = vmatprep.subr.mxu0 0.0
  %942 = vmatpush1.msra.mxu0 0.0
  %943 = vmatprep.subr.mxu0 0.0
  %944 = vmatpush1.msra.mxu0 0.0
  %945 = vmatprep.subr.mxu0 0.0
  %946 = vmatpush1.msra.mxu0 0.0
  %947 = vmatprep.subr.mxu0 0.0
  %948 = vmatpush1.msra.mxu0 0.0
  %949 = vmatprep.subr.mxu0 0.0
  %950 = vmatpush1.msra.mxu0 0.0
  %951 = vmatprep.subr.mxu0 0.0
  %952 = vmatpush1.msra.mxu0 0.0
  %953 = vmatprep.subr.mxu0 0.0
  %954 = vmatpush1.msra.mxu0 0.0
  %955 = vmatprep.subr.mxu0 0.0
  %956 = vmatpush1.msra.mxu0 0.0
  %957 = vmatprep.subr.mxu0 0.0
  %958 = vmatpush1.msra.mxu0 0.0
  %959 = vmatprep.subr.mxu0 0.0
  %960 = vmatpush1.msra.mxu0 0.0
  %961 = vmatprep.mubr.f32.mxu0 0.0
  %962 = vmatmul.mubr.f32.gmra.mrb[0].mxu0 %v723
  %v963 = vpop.f32.mrb[0].mxu0
  %v964 = vadd.f32 0.0, %v963
  %v965 = vpop.f32.mrb[0].mxu0
  %966 = vmatprep.mubr.f32.mxu0 0.0
  %967 = vmatmul.mubr.f32.gmra.mrb[0].mxu0 %v724
  %v968 = vpop.f32.mrb[0].mxu0
  %v969 = vadd.f32 0.0, %v968
  %v970 = vpop.f32.mrb[0].mxu0
  %971 = vmatprep.mubr.f32.mxu0 0.0
  %972 = vmatmul.mubr.f32.gmra.mrb[0].mxu0 %v725
  %v973 = vpop.f32.mrb[0].mxu0
  %v974 = vadd.f32 0.0, %v973
  %v975 = vpop.f32.mrb[0].mxu0
  %976 = vmatprep.mubr.f32.mxu0 0.0
  %977 = vmatmul.mubr.f32.gmra.mrb[0].mxu0 %v726
  %v978 = vpop.f32.mrb[0].mxu0
  %v979 = vadd.f32 0.0, %v978
  %v980 = vpop.f32.mrb[0].mxu0
  %981 = vdwg.mxu0
  %v982 = vadd.f32 %v879, %v964
  %v983 = vadd.f32 %v884, %v969
  %v984 = vadd.f32 %v889, %v974
  %v985 = vadd.f32 %v894, %v979
  %v986 = vadd.f32 %v982, %v983
  %v987 = vadd.f32 %v986, %v984
  %v988 = vadd.f32 %v987, %v985
  %v989 = vrot.slane %v988, 4
  %v990 = vadd.f32 %v988, %v989
  %v991 = vrot.slane %v990, 2
  %v992 = vadd.f32 %v990, %v991
  %v993 = vrot.slane %v992, 1
  %v994 = vadd.f32 %v992, %v993
  %v995 = vmul.f32 %v982, %v982
  %v996 = vmul.f32 %v983, %v983
  %v997 = vmul.f32 %v984, %v984
  %v998 = vmul.f32 %v985, %v985
  %v999 = vadd.f32 %v995, %v996
  %v1000 = vadd.f32 %v999, %v997
  %v1001 = vadd.f32 %v1000, %v998
  %v1002 = vrot.slane %v1001, 4
  %v1003 = vadd.f32 %v1001, %v1002
  %v1004 = vrot.slane %v1003, 2
  %v1005 = vadd.f32 %v1003, %v1004
  %v1006 = vrot.slane %v1005, 1
  %v1007 = vadd.f32 %v1005, %v1006
  %v1008 = vsel %vm471, %v994, %v1007
  %1009 = vmatprep.subr.mxu0 0.0
  %1010 = vmatpush1.msra.mxu0 %v24
  %1011 = vmatprep.subr.mxu0 0.0
  %1012 = vmatpush1.msra.mxu0 %v25
  %1013 = vmatprep.subr.mxu0 0.0
  %1014 = vmatpush1.msra.mxu0 %v26
  %1015 = vmatprep.subr.mxu0 0.0
  %1016 = vmatpush1.msra.mxu0 %v27
  %1017 = vmatprep.subr.mxu0 0.0
  %1018 = vmatpush1.msra.mxu0 %v28
  %1019 = vmatprep.subr.mxu0 0.0
  %1020 = vmatpush1.msra.mxu0 %v29
  %1021 = vmatprep.subr.mxu0 0.0
  %1022 = vmatpush1.msra.mxu0 %v30
  %1023 = vmatprep.subr.mxu0 0.0
  %1024 = vmatpush1.msra.mxu0 %v31
  %1025 = vmatprep.subr.mxu0 0.0
  %1026 = vmatpush1.msra.mxu0 %v32
  %1027 = vmatprep.subr.mxu0 0.0
  %1028 = vmatpush1.msra.mxu0 %v33
  %1029 = vmatprep.subr.mxu0 0.0
  %1030 = vmatpush1.msra.mxu0 %v34
  %1031 = vmatprep.subr.mxu0 0.0
  %1032 = vmatpush1.msra.mxu0 %v35
  %1033 = vmatprep.subr.mxu0 0.0
  %1034 = vmatpush1.msra.mxu0 %v36
  %1035 = vmatprep.subr.mxu0 0.0
  %1036 = vmatpush1.msra.mxu0 %v37
  %1037 = vmatprep.subr.mxu0 0.0
  %1038 = vmatpush1.msra.mxu0 %v38
  %1039 = vmatprep.subr.mxu0 0.0
  %1040 = vmatpush1.msra.mxu0 %v39
  %1041 = vmatprep.subr.mxu0 0.0
  %1042 = vmatpush1.msra.mxu0 0.0
  %1043 = vmatprep.subr.mxu0 0.0
  %1044 = vmatpush1.msra.mxu0 0.0
  %1045 = vmatprep.subr.mxu0 0.0
  %1046 = vmatpush1.msra.mxu0 0.0
  %1047 = vmatprep.subr.mxu0 0.0
  %1048 = vmatpush1.msra.mxu0 0.0
  %1049 = vmatprep.subr.mxu0 0.0
  %1050 = vmatpush1.msra.mxu0 0.0
  %1051 = vmatprep.subr.mxu0 0.0
  %1052 = vmatpush1.msra.mxu0 0.0
  %1053 = vmatprep.subr.mxu0 0.0
  %1054 = vmatpush1.msra.mxu0 0.0
  %1055 = vmatprep.subr.mxu0 0.0
  %1056 = vmatpush1.msra.mxu0 0.0
  %1057 = vmatprep.subr.mxu0 0.0
  %1058 = vmatpush1.msra.mxu0 0.0
  %1059 = vmatprep.subr.mxu0 0.0
  %1060 = vmatpush1.msra.mxu0 0.0
  %1061 = vmatprep.subr.mxu0 0.0
  %1062 = vmatpush1.msra.mxu0 0.0
  %1063 = vmatprep.subr.mxu0 0.0
  %1064 = vmatpush1.msra.mxu0 0.0
  %1065 = vmatprep.subr.mxu0 0.0
  %1066 = vmatpush1.msra.mxu0 0.0
  %1067 = vmatprep.subr.mxu0 0.0
  %1068 = vmatpush1.msra.mxu0 0.0
  %1069 = vmatprep.subr.mxu0 0.0
  %1070 = vmatpush1.msra.mxu0 0.0
  %1071 = vmatprep.subr.mxu0 0.0
  %1072 = vmatpush1.msra.mxu0 0.0
  %1073 = vmatprep.mubr.f32.mxu0 0.0
  %1074 = vmatmul.mubr.f32.gmra.mrb[0].mxu0 %v1008
  %v1075 = vpop.f32.mrb[0].mxu0
  %v1076 = vadd.f32 0.0, %v1075
  %v1077 = vpop.f32.mrb[0].mxu0
  %1078 = vdwg.mxu0
  %v1079 = vmul.f32 %v1076, 0.001953125
  %v1080 = vmul.f32 %v1079, %v1079
  %v1082 = vrot.slane %v1080, 7
  %v1084 = vsub.f32 %v1079, %v1082
  %v1085 = vadd.f32 %v1084, 1e-05
  %v1086 = vrsqrt.pop %v1085
  %v1088 = vrot.slane %v1086, 7
  %v1090 = vmul.f32 %v41, %v1088
  %v1092 = vrot.slane %v1090, 2
  %v1094 = vmul.f32 %v1079, %v1092
  %v1096 = vrot.slane %v1094, 5
  %v1098 = vsub.f32 %v41, %v1096
  %v1100 = vrot.slane %v1098, 2
  %v1102 = vsel %vm471, %v1092, %v1100
  %v1104 = vsel %vm561, %v1102, 0
  %1106 = vmatprep.subr.mxu0 0.0
  %1107 = vmatpush1.msra.mxu0 %v40
  %1108 = vmatprep.subr.mxu0 0.0
  %1109 = vmatpush1.msra.mxu0 0.0
  %1110 = vmatprep.subr.mxu0 0.0
  %1111 = vmatpush1.msra.mxu0 0.0
  %1112 = vmatprep.subr.mxu0 0.0
  %1113 = vmatpush1.msra.mxu0 0.0
  %1114 = vmatprep.subr.mxu0 0.0
  %1115 = vmatpush1.msra.mxu0 0.0
  %1116 = vmatprep.subr.mxu0 0.0
  %1117 = vmatpush1.msra.mxu0 0.0
  %1118 = vmatprep.subr.mxu0 0.0
  %1119 = vmatpush1.msra.mxu0 0.0
  %1120 = vmatprep.subr.mxu0 0.0
  %1121 = vmatpush1.msra.mxu0 0.0
  %1122 = vmatprep.subr.mxu0 0.0
  %1123 = vmatpush1.msra.mxu0 0.0
  %1124 = vmatprep.subr.mxu0 0.0
  %1125 = vmatpush1.msra.mxu0 0.0
  %1126 = vmatprep.subr.mxu0 0.0
  %1127 = vmatpush1.msra.mxu0 0.0
  %1128 = vmatprep.subr.mxu0 0.0
  %1129 = vmatpush1.msra.mxu0 0.0
  %1130 = vmatprep.subr.mxu0 0.0
  %1131 = vmatpush1.msra.mxu0 0.0
  %1132 = vmatprep.subr.mxu0 0.0
  %1133 = vmatpush1.msra.mxu0 0.0
  %1134 = vmatprep.subr.mxu0 0.0
  %1135 = vmatpush1.msra.mxu0 0.0
  %1136 = vmatprep.subr.mxu0 0.0
  %1137 = vmatpush1.msra.mxu0 0.0
  %1138 = vmatprep.subr.mxu0 0.0
  %1139 = vmatpush1.msra.mxu0 0.0
  %1140 = vmatprep.subr.mxu0 0.0
  %1141 = vmatpush1.msra.mxu0 0.0
  %1142 = vmatprep.subr.mxu0 0.0
  %1143 = vmatpush1.msra.mxu0 0.0
  %1144 = vmatprep.subr.mxu0 0.0
  %1145 = vmatpush1.msra.mxu0 0.0
  %1146 = vmatprep.subr.mxu0 0.0
  %1147 = vmatpush1.msra.mxu0 0.0
  %1148 = vmatprep.subr.mxu0 0.0
  %1149 = vmatpush1.msra.mxu0 0.0
  %1150 = vmatprep.subr.mxu0 0.0
  %1151 = vmatpush1.msra.mxu0 0.0
  %1152 = vmatprep.subr.mxu0 0.0
  %1153 = vmatpush1.msra.mxu0 0.0
  %1154 = vmatprep.subr.mxu0 0.0
  %1155 = vmatpush1.msra.mxu0 0.0
  %1156 = vmatprep.subr.mxu0 0.0
  %1157 = vmatpush1.msra.mxu0 0.0
  %1158 = vmatprep.subr.mxu0 0.0
  %1159 = vmatpush1.msra.mxu0 0.0
  %1160 = vmatprep.subr.mxu0 0.0
  %1161 = vmatpush1.msra.mxu0 0.0
  %1162 = vmatprep.subr.mxu0 0.0
  %1163 = vmatpush1.msra.mxu0 0.0
  %1164 = vmatprep.subr.mxu0 0.0
  %1165 = vmatpush1.msra.mxu0 0.0
  %1166 = vmatprep.subr.mxu0 0.0
  %1167 = vmatpush1.msra.mxu0 0.0
  %1168 = vmatprep.subr.mxu0 0.0
  %1169 = vmatpush1.msra.mxu0 0.0
  %1170 = vmatprep.mubr.f32.mxu0 0.0
  %1171 = vmatmul.mubr.f32.gmra.mrb[0].mxu0 %v1104
  %v1172 = vpop.f32.mrb[0].mxu0
  %v1173 = vadd.f32 0.0, %v1172
  %v1174 = vpop.f32.mrb[0].mxu0
  %1175 = vdwg.mxu0
  %v1176 = vlaneseq
  %v1177 = vshrl.u32 %v1176, 7
  %v1178 = vsub.s32 0, %v1177
  %v1179 = vrot.slane %v1173, %v1178
  %v1180 = vmul.f32 %v982, %v1179
  %v1181 = vmul.f32 %v983, %v1179
  %v1182 = vmul.f32 %v984, %v1179
  %v1183 = vmul.f32 %v985, %v1179
  %v1184 = vlaneseq
  %v1185 = vshrl.u32 %v1184, 7
  %v1186 = vsub.s32 1, %v1185
  %v1187 = vrot.slane %v1173, %v1186
  %v1188 = vadd.f32 %v1180, %v1187
  %v1189 = vadd.f32 %v1181, %v1187
  %v1190 = vadd.f32 %v1182, %v1187
  %v1191 = vadd.f32 %v1183, %v1187
  %v1192 = vmax.f32 %v1188, 0.0
  %v1193 = vmax.f32 %v1189, 0.0
  %v1194 = vmax.f32 %v1190, 0.0
  %v1195 = vmax.f32 %v1191, 0.0
  %1196 = vst [vmem:[%s5] sm:$0xff] %v1192
  %1197 = vst [vmem:[%s5 + $0x8] sm:$0xff] %v1193
  %1198 = vst [vmem:[%s5 + $0x10] sm:$0xff] %v1194
  %1199 = vst [vmem:[%s5 + $0x18] sm:$0xff] %v1195
  // Predicated region
  $region22: #{conv_block_forward.1} parent=0 // pred_check
    _
  $region23: #{conv_block_forward.1} parent=0 // pred_check_branch
    %1201 = sbr.rel (0) target = $region25
  $region24: #{conv_block_forward.1} parent=0 // pred_region
    _
  $region25: #{conv_block_forward.1} parent=0 // pred_fallthru
    _
  // Predicated region
  $region26: #{conv_block_forward.1} parent=0 // pred_check
    _
  $region27: #{conv_block_forward.1} parent=0 // pred_check_branch
    %1203 = sbr.rel (0) target = $region29
  $region28: #{conv_block_forward.1} parent=0 // pred_region
    _
  $region29: #{conv_block_forward.1} parent=0 // pred_fallthru
    _

</llo_original>
